<compile_context>
chip_gen: v7x
topology: tpu7x:2x2x1
jax: 0.10.0
libtpu: 0.0.40
codegen_flags: <defaults>
</compile_context>

<pallas_src>
import functools

import jax
import jax.numpy as jnp
from jax import lax
from jax.experimental import pallas as pl
from jax.experimental.pallas import tpu as pltpu

_SLACK = 2 << 20          # VMEM slack for compiler-internal scratch
_TK_MAX = 8 * 1024        # K-tile cap; DMA efficiency is saturated well before this


def _round_up(x, m):
    return ((x + m - 1) // m) * m


def _round_down(x, m):
    return (x // m) * m


# --------------------------- hardware queries --------------------------------


def _tpu_vmem_capacity_bytes():
    try:
        cap = int(getattr(pltpu.get_tpu_info(), "vmem_capacity_bytes", 0))
        if cap > 0:
            return cap
    except Exception:
        pass
    return 64 << 20   # conservative: v7x per-TensorCore VMEM


def _tensorcores_per_chip():
    """Best-effort TensorCore count per chip (megacore row split heuristic)."""
    try:
        for attr in ("num_cores", "cores_per_chip", "num_tensorcores"):
            v = getattr(pltpu.get_tpu_info(), attr, None)
            if isinstance(v, int) and v > 0:
                return v
    except Exception:
        pass
    try:
        kind = str(getattr(jax.devices()[0], "device_kind", "")).lower()
        if ("v4" in kind) or ("v5p" in kind) or ("v7" in kind) or ("7x" in kind):
            return 2
    except Exception:
        pass
    return 1


# ------------------------------ planning -------------------------------------


def _vmem_need(M, TM, TK, itemsize, split, n_k):
    """Bytes the pipeline actually allocates, with (8,128) layout padding."""
    Mp = _round_up(M, 128)     # lane-padded Gram/target column dim
    Ms = _round_up(M, 8)       # sublane-padded feature row dim
    TMp = _round_up(TM, 8)
    need = 2 * Ms * TK * itemsize                 # feature (RHS) tiles, double buffered
    if split:
        need += 2 * TMp * TK * itemsize           # LHS row tiles, double buffered
    need += 2 * TMp * Mp * 4                      # resident target / gram output (2 bufs)
    if n_k > 1:
        need += TMp * Mp * 4                      # f32 accumulator scratch
    return need + _SLACK


def _plan(M, K, itemsize, row_blocks=None, tk_override=None):
    """Choose (n_m, TM, n_k, TK, vmem_limit_bytes) for the given problem."""
    capacity = _tpu_vmem_capacity_bytes()
    budget = max(capacity - max(capacity // 8, 8 << 20), 8 << 20)   # compiler headroom
    K128 = _round_up(max(K, 1), 128)

    # Candidate row splits: TM must be a multiple of 8 that divides M.
    cands = [1]
    for n in (2, 4, 8, 16):
        if M % n == 0 and (M // n) % 8 == 0:
            cands.append(n)

    if row_blocks is not None:
        if row_blocks not in cands:
            raise ValueError(
                f"row_blocks={row_blocks} must divide M={M} into multiples of 8")
        order = [row_blocks]
    else:
        cores = _tensorcores_per_chip()
        # Prefer a megacore row split only in the compute-bound regime.
        prefer = cores if (cores > 1 and M >= 512 and cores in cands) else 1
        order = [prefer] + [n for n in cands if n != prefer]

    best = None
    for n_m in order:
        tm = M // n_m
        split = n_m > 1
        if tk_override is not None:
            tk = int(tk_override)
        else:
            per_col = (2 * _round_up(M, 8) + (2 * tm if split else 0)) * itemsize
            fixed = 3 * _round_up(tm, 8) * _round_up(M, 128) * 4 + _SLACK
            avail = max(budget - fixed, 0)
            tk = max(128, min(K128, _TK_MAX,
                              _round_down(avail // max(per_col, 1), 128)))
            n_k0 = pl.cdiv(K, tk)
            tk = min(tk, _round_up(pl.cdiv(K, n_k0), 128))   # balance the tiles
        n_k = pl.cdiv(K, tk)
        need = _vmem_need(M, tm, tk, itemsize, split, n_k)
        limit = min(capacity, max(need + _SLACK, 16 << 20))
        cfg = (n_m, tm, n_k, tk, limit)
        if best is None or need < best[0]:
            best = (need, cfg)
        if need <= budget:
            return cfg
    return best[1]   # nothing fit the headroom budget; best effort


# ------------------------------ kernels ---------------------------------------


def _mask_tail(x, valid_cols):
    cols = lax.broadcasted_iota(jnp.int32, x.shape, 1)
    return jnp.where(cols < valid_cols, x, jnp.zeros_like(x))


def _partial_gram(lhs_ref, rhs_ref, k, *, K, TK, split, precision):
    """Partial Gram (row block) for the current K tile, f32 accumulation."""
    rhs = rhs_ref[...]
    lhs = lhs_ref[...] if split else rhs
    if K % TK != 0:
        # Tail of the last K tile is masked in-kernel (no host-side padding).
        valid = K - k * TK             # >= TK for every tile except the last
        rhs = _mask_tail(rhs, valid)
        lhs = _mask_tail(lhs, valid) if split else rhs
    return lax.dot_general(
        lhs, rhs,
        dimension_numbers=(((1,), (1,)), ((), ())),   # F_i @ F^T, no transpose
        preferred_element_type=jnp.float32,
        precision=precision,
    )


def _gram_kernel(*refs, scale, K, TK, n_k, split, precision):
    idx = 0
    if split:
        lhs_ref = refs[idx]; idx += 1
    rhs_ref = refs[idx]; idx += 1
    if not split:
        lhs_ref = rhs_ref
    g_ref = refs[idx]; idx += 1
    acc_ref = refs[idx] if n_k > 1 else None

    k = pl.program_id(1)
    g = _partial_gram(lhs_ref, rhs_ref, k, K=K, TK=TK, split=split, precision=precision)

    if n_k == 1:                       # single K tile: skip the accumulator entirely
        g_ref[...] = (g * scale).astype(g_ref.dtype)
        return

    @pl.when(k == 0)
    def _():
        acc_ref[...] = g               # direct write: no zero-store + add on tile 0

    @pl.when(k > 0)
    def _():
        acc_ref[...] += g

    @pl.when(k == n_k - 1)
    def _():
        g_ref[...] = (acc_ref[...] * scale).astype(g_ref.dtype)


def _loss_kernel(*refs, scale, K, TK, n_k, split, precision):
    idx = 0
    if split:
        lhs_ref = refs[idx]; idx += 1
    rhs_ref = refs[idx]; idx += 1
    if not split:
        lhs_ref = rhs_ref
    tgt_ref = refs[idx]; idx += 1
    loss_ref = refs[idx]; idx += 1
    acc_ref = refs[idx] if n_k > 1 else None

    k = pl.program_id(1)
    g = _partial_gram(lhs_ref, rhs_ref, k, K=K, TK=TK, split=split, precision=precision)

    def _finish(total):
        gm = total * scale
        d = gm - tgt_ref[...].astype(jnp.float32)
        loss_ref[0, 0] = jnp.sum(d * d)     # partial SSE for this Gram row block

    if n_k == 1:
        _finish(g)
        return

    @pl.when(k == 0)
    def _():
        acc_ref[...] = g

    @pl.when(k > 0)
    def _():
        acc_ref[...] += g

    @pl.when(k == n_k - 1)
    def _():
        _finish(acc_ref[...])


# --------------------------- cached builders ----------------------------------


def _feat_dtype(input_dtype_name, compute_dtype_name):
    if compute_dtype_name is not None:
        return jnp.dtype(compute_dtype_name)
    dt = jnp.dtype(input_dtype_name)
    return dt if jnp.issubdtype(dt, jnp.floating) else jnp.dtype(jnp.float32)


def _prec_name(p):
    return p if isinstance(p, str) else p.name


@functools.lru_cache(maxsize=None)
def _build_gram_fn(shape, dtype_name, compute_dtype_name=None,
                   precision_name="HIGHEST", row_blocks=None, tk_override=None):
    a, b, c, d = shape
    M, K = a * b, c * d
    feat_dtype = _feat_dtype(dtype_name, compute_dtype_name)
    precision = getattr(lax.Precision, precision_name)
    n_m, TM, n_k, TK, vmem_limit = _plan(M, K, feat_dtype.itemsize, row_blocks, tk_override)
    split = n_m > 1
    scale = 1.0 / float(a * b * c * d)

    in_specs = []
    if split:
        in_specs.append(pl.BlockSpec((TM, TK), lambda i, k: (i, k)))   # LHS row block
    in_specs.append(pl.BlockSpec((M, TK), lambda i, k: (0, k)))        # full feature cols
    scratch = (pltpu.VMEM((TM, M), jnp.float32),) if n_k > 1 else ()

    call = pl.pallas_call(
        functools.partial(_gram_kernel, scale=scale, K=K, TK=TK, n_k=n_k,
                          split=split, precision=precision),
        out_shape=jax.ShapeDtypeStruct((M, M), jnp.float32),
        grid_spec=pltpu.PrefetchScalarGridSpec(
            num_scalar_prefetch=0,
            grid=(n_m, n_k),
            in_specs=in_specs,
            out_specs=pl.BlockSpec((TM, M), lambda i, k: (i, 0)),
            scratch_shapes=scratch,
        ),
        compiler_params=pltpu.CompilerParams(
            dimension_semantics=("parallel", "arbitrary"),
            vmem_limit_bytes=vmem_limit,
        ),
    )

    def gram(x_nchw):
        feats = x_nchw.reshape(M, K).astype(feat_dtype)   # no host-side K padding
        if split:
            return call(feats, feats)
        return call(feats)

    return jax.jit(gram)


@functools.lru_cache(maxsize=None)
def _build_loss_fn(shape, dtype_name, compute_dtype_name=None,
                   precision_name="HIGHEST", row_blocks=None, tk_override=None):
    a, b, c, d = shape
    M, K = a * b, c * d
    feat_dtype = _feat_dtype(dtype_name, compute_dtype_name)
    precision = getattr(lax.Precision, precision_name)
    n_m, TM, n_k, TK, vmem_limit = _plan(M, K, feat_dtype.itemsize, row_blocks, tk_override)
    split = n_m > 1
    scale = 1.0 / float(a * b * c * d)
    inv_numel = 1.0 / float(M * M)

    in_specs = []
    if split:
        in_specs.append(pl.BlockSpec((TM, TK), lambda i, k: (i, k)))   # LHS row block
    in_specs.append(pl.BlockSpec((M, TK), lambda i, k: (0, k)))        # full feature cols
    in_specs.append(pl.BlockSpec((TM, M), lambda i, k: (i, 0)))        # target Gram rows
    scratch = (pltpu.VMEM((TM, M), jnp.float32),) if n_k > 1 else ()

    call = pl.pallas_call(
        functools.partial(_loss_kernel, scale=scale, K=K, TK=TK, n_k=n_k,
                          split=split, precision=precision),
        out_shape=jax.ShapeDtypeStruct((n_m, 1), jnp.float32),   # per-row-block SSE
        grid_spec=pltpu.PrefetchScalarGridSpec(
            num_scalar_prefetch=0,
            grid=(n_m, n_k),
            in_specs=in_specs,
            out_specs=pl.BlockSpec((1, 1), lambda i, k: (i, 0),
                                   memory_space=pltpu.SMEM),
            scratch_shapes=scratch,
        ),
        compiler_params=pltpu.CompilerParams(
            dimension_semantics=("parallel", "arbitrary"),
            vmem_limit_bytes=vmem_limit,
        ),
    )

    def fwd(x_nchw, target_gram):
        feats = x_nchw.reshape(M, K).astype(feat_dtype)   # no host-side K padding
        if split:
            partials = call(feats, feats, target_gram)
        else:
            partials = call(feats, target_gram)
        # F.mse_loss default reduction='mean' over all M*M elements of G.
        return jnp.sum(partials) * inv_numel

    return jax.jit(fwd)


# ------------------------------ wrappers ---------------------------------------


def gram_matrix_pallas(x_nchw, *, compute_dtype=None, precision="HIGHEST"):
    """Pallas equivalent of gram_matrix(input) for NCHW input."""
    cdn = None if compute_dtype is None else jnp.dtype(compute_dtype).name
    fn = _build_gram_fn(tuple(map(int, x_nchw.shape)), str(x_nchw.dtype),
                        cdn, _prec_name(precision))
    return fn(x_nchw)


class StyleLossPallas:
    """Mirror of the PyTorch StyleLoss module (forward pass only)."""

    def __init__(self, target_feature_nchw, *, compute_dtype=None, precision="HIGHEST"):
        # compute_dtype=jnp.bfloat16 halves HBM feature reads (memory-bound regime);
        # precision="HIGH"/"DEFAULT" trades accuracy for MXU throughput (v5e).
        self._compute_dtype = None if compute_dtype is None else jnp.dtype(compute_dtype).name
        self._precision = _prec_name(precision)
        # Target Gram is computed once at init (detached constant).
        self.target = jax.block_until_ready(
            gram_matrix_pallas(target_feature_nchw,
                               compute_dtype=compute_dtype, precision=precision))
        self.loss = None

    def forward(self, x_nchw):
        fwd = _build_loss_fn(tuple(map(int, x_nchw.shape)), str(x_nchw.dtype),
                             self._compute_dtype, self._precision)
        self.loss = fwd(x_nchw, self.target)
        # Module forward returns its input unchanged (pass-through).
        return x_nchw

    __call__ = forward


# ------------------------------ reference --------------------------------------


def _gram_ref(x):
    a, b, c, d = x.shape
    f = x.reshape(a * b, c * d).astype(jnp.float32)
    g = lax.dot_general(f, f, (((1,), (1,)), ((), ())),
                        precision=lax.Precision.HIGHEST)
    return g / float(a * b * c * d)


def _style_loss_ref(x, target):
    return jnp.mean((_gram_ref(x) - target) ** 2)


# -------------------------------- main ------------------------------------------


if __name__ == "__main__":
    key = jax.random.PRNGKey(0)
    k1, k2, k3, k4, k5, k6 = jax.random.split(key, 6)

    # 1) Module-level check: batch=2, channels=4, 16x16 (M=8, K=256, single K tile).
    shape = (2, 4, 16, 16)
    target_feature = jax.random.normal(k1, shape, dtype=jnp.float32)
    x = jax.random.normal(k2, shape, dtype=jnp.float32)

    module = StyleLossPallas(target_feature)
    out = module(x)
    loss = jax.block_until_ready(module.loss)
    gram_t = jax.block_until_ready(module.target)

    ref_target = _gram_ref(target_feature)
    ref_loss = _style_loss_ref(x, ref_target)
    assert out.shape == x.shape and bool(jnp.allclose(out, x)), "forward must pass input through"
    assert bool(jnp.allclose(gram_t, ref_target, atol=1e-6, rtol=1e-4)), "target gram mismatch"
    assert bool(jnp.allclose(loss, ref_loss, atol=1e-7, rtol=1e-4)), "loss mismatch"

    # 2) Multi-tile K reduction + in-kernel tail masking: K = 48*48 = 2304 with a
    #    forced 1024-wide K tile -> 3 tiles, last tile has only 256 valid columns.
    shape2 = (2, 4, 48, 48)
    tgt2 = jax.random.normal(k3, shape2, dtype=jnp.float32)
    x2 = jax.random.normal(k4, shape2, dtype=jnp.float32)
    gram2 = _build_gram_fn(shape2, "float32", None, "HIGHEST", None, 1024)
    loss2_fn = _build_loss_fn(shape2, "float32", None, "HIGHEST", None, 1024)
    g2 = jax.block_until_ready(gram2(tgt2))
    l2 = jax.block_until_ready(loss2_fn(x2, g2))
    assert bool(jnp.allclose(g2, _gram_ref(tgt2), atol=1e-6, rtol=1e-4)), "tiled gram mismatch"
    assert bool(jnp.allclose(l2, _style_loss_ref(x2, _gram_ref(tgt2)),
                             atol=1e-7, rtol=1e-4)), "tiled loss mismatch"

    # 3) Row-split ("parallel" megacore-style) path: M=16 split into 2 row blocks of 8,
    #    K=144 (tail-masked).  The loss variant also forces TK=128 -> 2 K tiles.
    shape3 = (1, 16, 12, 12)
    tgt3 = jax.random.normal(k5, shape3, dtype=jnp.float32)
    x3 = jax.random.normal(k6, shape3, dtype=jnp.float32)
    gram3 = _build_gram_fn(shape3, "float32", None, "HIGHEST", 2, None)
    loss3_fn = _build_loss_fn(shape3, "float32", None, "HIGHEST", 2, 128)
    g3 = jax.block_until_ready(gram3(tgt3))
    l3 = jax.block_until_ready(loss3_fn(x3, g3))
    assert bool(jnp.allclose(g3, _gram_ref(tgt3), atol=1e-6, rtol=1e-4)), "split gram mismatch"
    assert bool(jnp.allclose(l3, _style_loss_ref(x3, _gram_ref(tgt3)),
                             atol=1e-7, rtol=1e-4)), "split loss mismatch"

    print("KERNEL_OK")
</pallas_src>

<mosaic_0001>
module attributes {stable_mosaic.version = 11 : i64} {
  func.func @_gram_kernel(%arg0: i32, %arg1: i32, %arg2: memref<8x256xf32, #tpu.memory_space<vmem>>, %arg3: memref<8x8xf32, #tpu.memory_space<vmem>>) attributes {dimension_semantics = [#tpu.dimension_semantics<parallel>, #tpu.dimension_semantics<arbitrary>], iteration_bounds = array<i64: 1, 1>, scalar_prefetch = 0 : i64, scratch_operands = 0 : i64, tpu.core_type = #tpu.core_type<tc>, window_params = [{transform_indices = @transform_0, window_bounds = array<i64: 8, 256>}, {transform_indices = @transform_1, window_bounds = array<i64: 8, 8>}]} {
    %c0 = arith.constant 0 : index
    %c0_0 = arith.constant 0 : index
    %0 = vector.load %arg2[%c0, %c0_0] : memref<8x256xf32, #tpu.memory_space<vmem>>, vector<8x256xf32>
    %cst = arith.constant dense<0.000000e+00> : vector<8x8xf32>
    %1 = tpu.matmul %0, %0, %cst {dimension_numbers = #tpu.dot_dimension_numbers<[1], [1], [0], [0], [0, 0, 1, 0], [], []>, precision = #tpu.contract_precision<fp32>} : vector<8x256xf32>, vector<8x256xf32>, vector<8x8xf32> -> vector<8x8xf32>
    %cst_1 = arith.constant 4.8828125E-4 : f32
    %2 = vector.broadcast %cst_1 : f32 to vector<8x8xf32>
    %3 = arith.mulf %1, %2 : vector<8x8xf32>
    %c0_2 = arith.constant 0 : index
    %c0_3 = arith.constant 0 : index
    %4 = vector.load %arg3[%c0_2, %c0_3] : memref<8x8xf32, #tpu.memory_space<vmem>>, vector<8x8xf32>
    tpu.vector_store %arg3[%c0_2, %c0_3], %3 {strides = array<i32>} : memref<8x8xf32, #tpu.memory_space<vmem>>, vector<8x8xf32>,
    return
  }
  func.func @transform_0(%arg0: i32, %arg1: i32) -> (i32, i32) {
    %c0_i32 = arith.constant 0 : i32
    %c0_i32_0 = arith.constant 0 : i32
    return %c0_i32, %arg1 : i32, i32
  }
  func.func @transform_1(%arg0: i32, %arg1: i32) -> (i32, i32) {
    %c0_i32 = arith.constant 0 : i32
    %c0_i32_0 = arith.constant 0 : i32
    return %arg0, %c0_i32 : i32, i32
  }
}

</mosaic_0001>

<llo_original>
// kernel: gram.1
$region0: #{gram.1}
  #allocation0 [shape = 'u32[]', space=smem, size = 0x4, offset = 0x4, fixed_abs, tag = 'smem constant byte address 0x4 - core index']
  #allocation1 [shape = 'u32[144,128]{1,0:T(1,128)}', space=vmem, size = 0x12000, scoped, tag = 'internal scratch']
  %s0 = inlined_call_operand.vmem [shape: f32[8,256], index: 0, kind: input, shape index: {}]
  %s1 = inlined_call_operand.hbm [shape: f32[8,8], index: 1, kind: output, shape index: {}]
  %s2 = sld [smem:[#allocation0]]
  $region14: #{gram.1} parent=0
    _
  %s4 = ssub.s32 1, %s2
  %s5 = scalar_select 0, %s4, %s2
  $region1: #{gram.1} parent=0
    #allocation2 [shape = 'u8[4096]{0}', space=vmem, size = 0x1000, scoped, tag = 'output window, operand 0, single buffered']
    #allocation3 [shape = 's32[1]{0}', space=sflag, size = 0x4, scoped, tag = 'scoped memory for gram.1']
    %6 = vsyncpa [#allocation3], 0
    // Predicated region
    $region2: #{gram.1} parent=1 // pred_check
      _
    $region3: #{gram.1} parent=1 // pred_check_branch
      %8 = sbr.rel (0) target = $region5
    $region4: #{gram.1} parent=1 // pred_region
      _
    $region5: #{gram.1} parent=1 // pred_fallthru
      _
    %v9 = vld [vmem:[%s0] sm:$0xff]
    %v10 = vld [vmem:[%s0 + $0x8] sm:$0xff]
    %v11 = vand.u32 %v10, 4294901760
    %12 = vmatprep.subr.mxu0 %v11
    %v13 = vand.u32 %v9, 4294901760
    %14 = vmatpush1.xpose.msra.mxu0 %v13
    %15 = vmatprep.subr.mxu0 0.0
    %16 = vmatpush1.xpose.msra.mxu0 0.0
    %17 = vmatprep.subr.mxu0 0.0
    %18 = vmatpush1.xpose.msra.mxu0 0.0
    %19 = vmatprep.subr.mxu0 0.0
    %20 = vmatpush1.xpose.msra.mxu0 0.0
    %21 = vmatprep.subr.mxu0 0.0
    %22 = vmatpush1.xpose.msra.mxu0 0.0
    %23 = vmatprep.subr.mxu0 0.0
    %24 = vmatpush1.xpose.msra.mxu0 0.0
    %25 = vmatprep.subr.mxu0 0.0
    %26 = vmatpush1.xpose.msra.mxu0 0.0
    %27 = vmatprep.subr.mxu0 0.0
    %28 = vmatpush1.xpose.msra.mxu0 0.0
    %29 = vmatprep.subr.mxu0 0.0
    %30 = vmatpush1.xpose.msra.mxu0 0.0
    %31 = vmatprep.subr.mxu0 0.0
    %32 = vmatpush1.xpose.msra.mxu0 0.0
    %33 = vmatprep.subr.mxu0 0.0
    %34 = vmatpush1.xpose.msra.mxu0 0.0
    %35 = vmatprep.subr.mxu0 0.0
    %36 = vmatpush1.xpose.msra.mxu0 0.0
    %37 = vmatprep.subr.mxu0 0.0
    %38 = vmatpush1.xpose.msra.mxu0 0.0
    %39 = vmatprep.subr.mxu0 0.0
    %40 = vmatpush1.xpose.msra.mxu0 0.0
    %41 = vmatprep.subr.mxu0 0.0
    %42 = vmatpush1.xpose.msra.mxu0 0.0
    %43 = vmatprep.subr.mxu0 0.0
    %44 = vmatpush1.xpose.msra.mxu0 0.0
    %45 = vmatprep.subr.mxu0 0.0
    %46 = vmatpush1.xpose.msra.mxu0 0.0
    %47 = vmatprep.subr.mxu0 0.0
    %48 = vmatpush1.xpose.msra.mxu0 0.0
    %49 = vmatprep.subr.mxu0 0.0
    %50 = vmatpush1.xpose.msra.mxu0 0.0
    %51 = vmatprep.subr.mxu0 0.0
    %52 = vmatpush1.xpose.msra.mxu0 0.0
    %53 = vmatprep.subr.mxu0 0.0
    %54 = vmatpush1.xpose.msra.mxu0 0.0
    %55 = vmatprep.subr.mxu0 0.0
    %56 = vmatpush1.xpose.msra.mxu0 0.0
    %57 = vmatprep.subr.mxu0 0.0
    %58 = vmatpush1.xpose.msra.mxu0 0.0
    %59 = vmatprep.subr.mxu0 0.0
    %60 = vmatpush1.xpose.msra.mxu0 0.0
    %61 = vmatprep.subr.mxu0 0.0
    %62 = vmatpush1.xpose.msra.mxu0 0.0
    %63 = vmatprep.subr.mxu0 0.0
    %64 = vmatpush1.xpose.msra.mxu0 0.0
    %65 = vmatprep.subr.mxu0 0.0
    %66 = vmatpush1.xpose.msra.mxu0 0.0
    %67 = vmatprep.subr.mxu0 0.0
    %68 = vmatpush1.xpose.msra.mxu0 0.0
    %69 = vmatprep.subr.mxu0 0.0
    %70 = vmatpush1.xpose.msra.mxu0 0.0
    %71 = vmatprep.subr.mxu0 0.0
    %72 = vmatpush1.xpose.msra.mxu0 0.0
    %73 = vmatprep.subr.mxu0 0.0
    %74 = vmatpush1.xpose.msra.mxu0 0.0
    %75 = vmatprep.subr.mxu0 0.0
    %76 = vmatpush1.xpose.msra.mxu0 0.0
    %v77 = vand.u32 %v10, 4294901760
    %v78 = vsub.f32 %v10, %v77
    %v79 = vand.u32 %v78, 4294901760
    %v80 = vsub.f32 %v78, %v79
    %v81 = vand.u32 %v80, 4294901760
    %82 = vmatprep.mubr.f32.mxu0 %v81
    %v83 = vand.u32 %v9, 4294901760
    %v84 = vsub.f32 %v9, %v83
    %v85 = vand.u32 %v84, 4294901760
    %v86 = vsub.f32 %v84, %v85
    %v87 = vand.u32 %v86, 4294901760
    %88 = vmatmul.mubr.f32.gmra.mrb[0].mxu0 %v87
    %v89 = vpop.f32.mrb[0].mxu0
    %v90 = vadd.f32 0.0, %v89
    %v91 = vpop.f32.mrb[0].mxu0
    %92 = vdwg.mxu0
    %v93 = vand.u32 %v10, 4294901760
    %v94 = vsub.f32 %v10, %v93
    %v95 = vand.u32 %v94, 4294901760
    %v96 = vsub.f32 %v94, %v95
    %v97 = vand.u32 %v96, 4294901760
    %98 = vmatprep.subr.mxu0 %v97
    %v99 = vand.u32 %v9, 4294901760
    %v100 = vsub.f32 %v9, %v99
    %v101 = vand.u32 %v100, 4294901760
    %v102 = vsub.f32 %v100, %v101
    %v103 = vand.u32 %v102, 4294901760
    %104 = vmatpush1.xpose.msra.mxu0 %v103
    %105 = vmatprep.subr.mxu0 0.0
    %106 = vmatpush1.xpose.msra.mxu0 0.0
    %107 = vmatprep.subr.mxu0 0.0
    %108 = vmatpush1.xpose.msra.mxu0 0.0
    %109 = vmatprep.subr.mxu0 0.0
    %110 = vmatpush1.xpose.msra.mxu0 0.0
    %111 = vmatprep.subr.mxu0 0.0
    %112 = vmatpush1.xpose.msra.mxu0 0.0
    %113 = vmatprep.subr.mxu0 0.0
    %114 = vmatpush1.xpose.msra.mxu0 0.0
    %115 = vmatprep.subr.mxu0 0.0
    %116 = vmatpush1.xpose.msra.mxu0 0.0
    %117 = vmatprep.subr.mxu0 0.0
    %118 = vmatpush1.xpose.msra.mxu0 0.0
    %119 = vmatprep.subr.mxu0 0.0
    %120 = vmatpush1.xpose.msra.mxu0 0.0
    %121 = vmatprep.subr.mxu0 0.0
    %122 = vmatpush1.xpose.msra.mxu0 0.0
    %123 = vmatprep.subr.mxu0 0.0
    %124 = vmatpush1.xpose.msra.mxu0 0.0
    %125 = vmatprep.subr.mxu0 0.0
    %126 = vmatpush1.xpose.msra.mxu0 0.0
    %127 = vmatprep.subr.mxu0 0.0
    %128 = vmatpush1.xpose.msra.mxu0 0.0
    %129 = vmatprep.subr.mxu0 0.0
    %130 = vmatpush1.xpose.msra.mxu0 0.0
    %131 = vmatprep.subr.mxu0 0.0
    %132 = vmatpush1.xpose.msra.mxu0 0.0
    %133 = vmatprep.subr.mxu0 0.0
    %134 = vmatpush1.xpose.msra.mxu0 0.0
    %135 = vmatprep.subr.mxu0 0.0
    %136 = vmatpush1.xpose.msra.mxu0 0.0
    %137 = vmatprep.subr.mxu0 0.0
    %138 = vmatpush1.xpose.msra.mxu0 0.0
    %139 = vmatprep.subr.mxu0 0.0
    %140 = vmatpush1.xpose.msra.mxu0 0.0
    %141 = vmatprep.subr.mxu0 0.0
    %142 = vmatpush1.xpose.msra.mxu0 0.0
    %143 = vmatprep.subr.mxu0 0.0
    %144 = vmatpush1.xpose.msra.mxu0 0.0
    %145 = vmatprep.subr.mxu0 0.0
    %146 = vmatpush1.xpose.msra.mxu0 0.0
    %147 = vmatprep.subr.mxu0 0.0
    %148 = vmatpush1.xpose.msra.mxu0 0.0
    %149 = vmatprep.subr.mxu0 0.0
    %150 = vmatpush1.xpose.msra.mxu0 0.0
    %151 = vmatprep.subr.mxu0 0.0
    %152 = vmatpush1.xpose.msra.mxu0 0.0
    %153 = vmatprep.subr.mxu0 0.0
    %154 = vmatpush1.xpose.msra.mxu0 0.0
    %155 = vmatprep.subr.mxu0 0.0
    %156 = vmatpush1.xpose.msra.mxu0 0.0
    %157 = vmatprep.subr.mxu0 0.0
    %158 = vmatpush1.xpose.msra.mxu0 0.0
    %159 = vmatprep.subr.mxu0 0.0
    %160 = vmatpush1.xpose.msra.mxu0 0.0
    %161 = vmatprep.subr.mxu0 0.0
    %162 = vmatpush1.xpose.msra.mxu0 0.0
    %163 = vmatprep.subr.mxu0 0.0
    %164 = vmatpush1.xpose.msra.mxu0 0.0
    %165 = vmatprep.subr.mxu0 0.0
    %166 = vmatpush1.xpose.msra.mxu0 0.0
    %v167 = vand.u32 %v10, 4294901760
    %168 = vmatprep.mubr.f32.mxu0 %v167
    %v169 = vand.u32 %v9, 4294901760
    %170 = vmatmul.mubr.f32.gmra.mrb[0].mxu0 %v169
    %v171 = vpop.f32.mrb[0].mxu0
    %v172 = vadd.f32 %v90, %v171
    %v173 = vpop.f32.mrb[0].mxu0
    %174 = vdwg.mxu0
    %v175 = vand.u32 %v10, 4294901760
    %v176 = vsub.f32 %v10, %v175
    %177 = vmatprep.subr.mxu0 %v176
    %v178 = vand.u32 %v9, 4294901760
    %v179 = vsub.f32 %v9, %v178
    %180 = vmatpush1.xpose.msra.mxu0 %v179
    %181 = vmatprep.subr.mxu0 0.0
    %182 = vmatpush1.xpose.msra.mxu0 0.0
    %183 = vmatprep.subr.mxu0 0.0
    %184 = vmatpush1.xpose.msra.mxu0 0.0
    %185 = vmatprep.subr.mxu0 0.0
    %186 = vmatpush1.xpose.msra.mxu0 0.0
    %187 = vmatprep.subr.mxu0 0.0
    %188 = vmatpush1.xpose.msra.mxu0 0.0
    %189 = vmatprep.subr.mxu0 0.0
    %190 = vmatpush1.xpose.msra.mxu0 0.0
    %191 = vmatprep.subr.mxu0 0.0
    %192 = vmatpush1.xpose.msra.mxu0 0.0
    %193 = vmatprep.subr.mxu0 0.0
    %194 = vmatpush1.xpose.msra.mxu0 0.0
    %195 = vmatprep.subr.mxu0 0.0
    %196 = vmatpush1.xpose.msra.mxu0 0.0
    %197 = vmatprep.subr.mxu0 0.0
    %198 = vmatpush1.xpose.msra.mxu0 0.0
    %199 = vmatprep.subr.mxu0 0.0
    %200 = vmatpush1.xpose.msra.mxu0 0.0
    %201 = vmatprep.subr.mxu0 0.0
    %202 = vmatpush1.xpose.msra.mxu0 0.0
    %203 = vmatprep.subr.mxu0 0.0
    %204 = vmatpush1.xpose.msra.mxu0 0.0
    %205 = vmatprep.subr.mxu0 0.0
    %206 = vmatpush1.xpose.msra.mxu0 0.0
    %207 = vmatprep.subr.mxu0 0.0
    %208 = vmatpush1.xpose.msra.mxu0 0.0
    %209 = vmatprep.subr.mxu0 0.0
    %210 = vmatpush1.xpose.msra.mxu0 0.0
    %211 = vmatprep.subr.mxu0 0.0
    %212 = vmatpush1.xpose.msra.mxu0 0.0
    %213 = vmatprep.subr.mxu0 0.0
    %214 = vmatpush1.xpose.msra.mxu0 0.0
    %215 = vmatprep.subr.mxu0 0.0
    %216 = vmatpush1.xpose.msra.mxu0 0.0
    %217 = vmatprep.subr.mxu0 0.0
    %218 = vmatpush1.xpose.msra.mxu0 0.0
    %219 = vmatprep.subr.mxu0 0.0
    %220 = vmatpush1.xpose.msra.mxu0 0.0
    %221 = vmatprep.subr.mxu0 0.0
    %222 = vmatpush1.xpose.msra.mxu0 0.0
    %223 = vmatprep.subr.mxu0 0.0
    %224 = vmatpush1.xpose.msra.mxu0 0.0
    %225 = vmatprep.subr.mxu0 0.0
    %226 = vmatpush1.xpose.msra.mxu0 0.0
    %227 = vmatprep.subr.mxu0 0.0
    %228 = vmatpush1.xpose.msra.mxu0 0.0
    %229 = vmatprep.subr.mxu0 0.0
    %230 = vmatpush1.xpose.msra.mxu0 0.0
    %231 = vmatprep.subr.mxu0 0.0
    %232 = vmatpush1.xpose.msra.mxu0 0.0
    %233 = vmatprep.subr.mxu0 0.0
    %234 = vmatpush1.xpose.msra.mxu0 0.0
    %235 = vmatprep.subr.mxu0 0.0
    %236 = vmatpush1.xpose.msra.mxu0 0.0
    %237 = vmatprep.subr.mxu0 0.0
    %238 = vmatpush1.xpose.msra.mxu0 0.0
    %239 = vmatprep.subr.mxu0 0.0
    %240 = vmatpush1.xpose.msra.mxu0 0.0
    %241 = vmatprep.subr.mxu0 0.0
    %242 = vmatpush1.xpose.msra.mxu0 0.0
    %v243 = vand.u32 %v10, 4294901760
    %v244 = vsub.f32 %v10, %v243
    %245 = vmatprep.mubr.f32.mxu0 %v244
    %v246 = vand.u32 %v9, 4294901760
    %v247 = vsub.f32 %v9, %v246
    %248 = vmatmul.mubr.f32.gmra.mrb[0].mxu0 %v247
    %v249 = vpop.f32.mrb[0].mxu0
    %v250 = vadd.f32 %v172, %v249
    %v251 = vpop.f32.mrb[0].mxu0
    %252 = vdwg.mxu0
    %v253 = vand.u32 %v10, 4294901760
    %254 = vmatprep.subr.mxu0 %v253
    %v255 = vand.u32 %v9, 4294901760
    %256 = vmatpush1.xpose.msra.mxu0 %v255
    %257 = vmatprep.subr.mxu0 0.0
    %258 = vmatpush1.xpose.msra.mxu0 0.0
    %259 = vmatprep.subr.mxu0 0.0
    %260 = vmatpush1.xpose.msra.mxu0 0.0
    %261 = vmatprep.subr.mxu0 0.0
    %262 = vmatpush1.xpose.msra.mxu0 0.0
    %263 = vmatprep.subr.mxu0 0.0
    %264 = vmatpush1.xpose.msra.mxu0 0.0
    %265 = vmatprep.subr.mxu0 0.0
    %266 = vmatpush1.xpose.msra.mxu0 0.0
    %267 = vmatprep.subr.mxu0 0.0
    %268 = vmatpush1.xpose.msra.mxu0 0.0
    %269 = vmatprep.subr.mxu0 0.0
    %270 = vmatpush1.xpose.msra.mxu0 0.0
    %271 = vmatprep.subr.mxu0 0.0
    %272 = vmatpush1.xpose.msra.mxu0 0.0
    %273 = vmatprep.subr.mxu0 0.0
    %274 = vmatpush1.xpose.msra.mxu0 0.0
    %275 = vmatprep.subr.mxu0 0.0
    %276 = vmatpush1.xpose.msra.mxu0 0.0
    %277 = vmatprep.subr.mxu0 0.0
    %278 = vmatpush1.xpose.msra.mxu0 0.0
    %279 = vmatprep.subr.mxu0 0.0
    %280 = vmatpush1.xpose.msra.mxu0 0.0
    %281 = vmatprep.subr.mxu0 0.0
    %282 = vmatpush1.xpose.msra.mxu0 0.0
    %283 = vmatprep.subr.mxu0 0.0
    %284 = vmatpush1.xpose.msra.mxu0 0.0
    %285 = vmatprep.subr.mxu0 0.0
    %286 = vmatpush1.xpose.msra.mxu0 0.0
    %287 = vmatprep.subr.mxu0 0.0
    %288 = vmatpush1.xpose.msra.mxu0 0.0
    %289 = vmatprep.subr.mxu0 0.0
    %290 = vmatpush1.xpose.msra.mxu0 0.0
    %291 = vmatprep.subr.mxu0 0.0
    %292 = vmatpush1.xpose.msra.mxu0 0.0
    %293 = vmatprep.subr.mxu0 0.0
    %294 = vmatpush1.xpose.msra.mxu0 0.0
    %295 = vmatprep.subr.mxu0 0.0
    %296 = vmatpush1.xpose.msra.mxu0 0.0
    %297 = vmatprep.subr.mxu0 0.0
    %298 = vmatpush1.xpose.msra.mxu0 0.0
    %299 = vmatprep.subr.mxu0 0.0
    %300 = vmatpush1.xpose.msra.mxu0 0.0
    %301 = vmatprep.subr.mxu0 0.0
    %302 = vmatpush1.xpose.msra.mxu0 0.0
    %303 = vmatprep.subr.mxu0 0.0
    %304 = vmatpush1.xpose.msra.mxu0 0.0
    %305 = vmatprep.subr.mxu0 0.0
    %306 = vmatpush1.xpose.msra.mxu0 0.0
    %307 = vmatprep.subr.mxu0 0.0
    %308 = vmatpush1.xpose.msra.mxu0 0.0
    %309 = vmatprep.subr.mxu0 0.0
    %310 = vmatpush1.xpose.msra.mxu0 0.0
    %311 = vmatprep.subr.mxu0 0.0
    %312 = vmatpush1.xpose.msra.mxu0 0.0
    %313 = vmatprep.subr.mxu0 0.0
    %314 = vmatpush1.xpose.msra.mxu0 0.0
    %315 = vmatprep.subr.mxu0 0.0
    %316 = vmatpush1.xpose.msra.mxu0 0.0
    %317 = vmatprep.subr.mxu0 0.0
    %318 = vmatpush1.xpose.msra.mxu0 0.0
    %v319 = vand.u32 %v10, 4294901760
    %v320 = vsub.f32 %v10, %v319
    %v321 = vand.u32 %v320, 4294901760
    %322 = vmatprep.mubr.f32.mxu0 %v321
    %v323 = vand.u32 %v9, 4294901760
    %v324 = vsub.f32 %v9, %v323
    %v325 = vand.u32 %v324, 4294901760
    %326 = vmatmul.mubr.f32.gmra.mrb[0].mxu0 %v325
    %v327 = vpop.f32.mrb[0].mxu0
    %v328 = vadd.f32 %v250, %v327
    %v329 = vpop.f32.mrb[0].mxu0
    %330 = vdwg.mxu0
    %v331 = vand.u32 %v10, 4294901760
    %v332 = vsub.f32 %v10, %v331
    %v333 = vand.u32 %v332, 4294901760
    %334 = vmatprep.subr.mxu0 %v333
    %v335 = vand.u32 %v9, 4294901760
    %v336 = vsub.f32 %v9, %v335
    %v337 = vand.u32 %v336, 4294901760
    %338 = vmatpush1.xpose.msra.mxu0 %v337
    %339 = vmatprep.subr.mxu0 0.0
    %340 = vmatpush1.xpose.msra.mxu0 0.0
    %341 = vmatprep.subr.mxu0 0.0
    %342 = vmatpush1.xpose.msra.mxu0 0.0
    %343 = vmatprep.subr.mxu0 0.0
    %344 = vmatpush1.xpose.msra.mxu0 0.0
    %345 = vmatprep.subr.mxu0 0.0
    %346 = vmatpush1.xpose.msra.mxu0 0.0
    %347 = vmatprep.subr.mxu0 0.0
    %348 = vmatpush1.xpose.msra.mxu0 0.0
    %349 = vmatprep.subr.mxu0 0.0
    %350 = vmatpush1.xpose.msra.mxu0 0.0
    %351 = vmatprep.subr.mxu0 0.0
    %352 = vmatpush1.xpose.msra.mxu0 0.0
    %353 = vmatprep.subr.mxu0 0.0
    %354 = vmatpush1.xpose.msra.mxu0 0.0
    %355 = vmatprep.subr.mxu0 0.0
    %356 = vmatpush1.xpose.msra.mxu0 0.0
    %357 = vmatprep.subr.mxu0 0.0
    %358 = vmatpush1.xpose.msra.mxu0 0.0
    %359 = vmatprep.subr.mxu0 0.0
    %360 = vmatpush1.xpose.msra.mxu0 0.0
    %361 = vmatprep.subr.mxu0 0.0
    %362 = vmatpush1.xpose.msra.mxu0 0.0
    %363 = vmatprep.subr.mxu0 0.0
    %364 = vmatpush1.xpose.msra.mxu0 0.0
    %365 = vmatprep.subr.mxu0 0.0
    %366 = vmatpush1.xpose.msra.mxu0 0.0
    %367 = vmatprep.subr.mxu0 0.0
    %368 = vmatpush1.xpose.msra.mxu0 0.0
    %369 = vmatprep.subr.mxu0 0.0
    %370 = vmatpush1.xpose.msra.mxu0 0.0
    %371 = vmatprep.subr.mxu0 0.0
    %372 = vmatpush1.xpose.msra.mxu0 0.0
    %373 = vmatprep.subr.mxu0 0.0
    %374 = vmatpush1.xpose.msra.mxu0 0.0
    %375 = vmatprep.subr.mxu0 0.0
    %376 = vmatpush1.xpose.msra.mxu0 0.0
    %377 = vmatprep.subr.mxu0 0.0
    %378 = vmatpush1.xpose.msra.mxu0 0.0
    %379 = vmatprep.subr.mxu0 0.0
    %380 = vmatpush1.xpose.msra.mxu0 0.0
    %381 = vmatprep.subr.mxu0 0.0
    %382 = vmatpush1.xpose.msra.mxu0 0.0
    %383 = vmatprep.subr.mxu0 0.0
    %384 = vmatpush1.xpose.msra.mxu0 0.0
    %385 = vmatprep.subr.mxu0 0.0
    %386 = vmatpush1.xpose.msra.mxu0 0.0
    %387 = vmatprep.subr.mxu0 0.0
    %388 = vmatpush1.xpose.msra.mxu0 0.0
    %389 = vmatprep.subr.mxu0 0.0
    %390 = vmatpush1.xpose.msra.mxu0 0.0
    %391 = vmatprep.subr.mxu0 0.0
    %392 = vmatpush1.xpose.msra.mxu0 0.0
    %393 = vmatprep.subr.mxu0 0.0
    %394 = vmatpush1.xpose.msra.mxu0 0.0
    %395 = vmatprep.subr.mxu0 0.0
    %396 = vmatpush1.xpose.msra.mxu0 0.0
    %397 = vmatprep.subr.mxu0 0.0
    %398 = vmatpush1.xpose.msra.mxu0 0.0
    %399 = vmatprep.subr.mxu0 0.0
    %400 = vmatpush1.xpose.msra.mxu0 0.0
    %v401 = vand.u32 %v10, 4294901760
    %402 = vmatprep.mubr.f32.mxu0 %v401
    %v403 = vand.u32 %v9, 4294901760
    %404 = vmatmul.mubr.f32.gmra.mrb[0].mxu0 %v403
    %v405 = vpop.f32.mrb[0].mxu0
    %v406 = vadd.f32 %v328, %v405
    %v407 = vpop.f32.mrb[0].mxu0
    %408 = vdwg.mxu0
    %v409 = vand.u32 %v10, 4294901760
    %410 = vmatprep.subr.mxu0 %v409
    %v411 = vand.u32 %v9, 4294901760
    %412 = vmatpush1.xpose.msra.mxu0 %v411
    %413 = vmatprep.subr.mxu0 0.0
    %414 = vmatpush1.xpose.msra.mxu0 0.0
    %415 = vmatprep.subr.mxu0 0.0
    %416 = vmatpush1.xpose.msra.mxu0 0.0
    %417 = vmatprep.subr.mxu0 0.0
    %418 = vmatpush1.xpose.msra.mxu0 0.0
    %419 = vmatprep.subr.mxu0 0.0
    %420 = vmatpush1.xpose.msra.mxu0 0.0
    %421 = vmatprep.subr.mxu0 0.0
    %422 = vmatpush1.xpose.msra.mxu0 0.0
    %423 = vmatprep.subr.mxu0 0.0
    %424 = vmatpush1.xpose.msra.mxu0 0.0
    %425 = vmatprep.subr.mxu0 0.0
    %426 = vmatpush1.xpose.msra.mxu0 0.0
    %427 = vmatprep.subr.mxu0 0.0
    %428 = vmatpush1.xpose.msra.mxu0 0.0
    %429 = vmatprep.subr.mxu0 0.0
    %430 = vmatpush1.xpose.msra.mxu0 0.0
    %431 = vmatprep.subr.mxu0 0.0
    %432 = vmatpush1.xpose.msra.mxu0 0.0
    %433 = vmatprep.subr.mxu0 0.0
    %434 = vmatpush1.xpose.msra.mxu0 0.0
    %435 = vmatprep.subr.mxu0 0.0
    %436 = vmatpush1.xpose.msra.mxu0 0.0
    %437 = vmatprep.subr.mxu0 0.0
    %438 = vmatpush1.xpose.msra.mxu0 0.0
    %439 = vmatprep.subr.mxu0 0.0
    %440 = vmatpush1.xpose.msra.mxu0 0.0
    %441 = vmatprep.subr.mxu0 0.0
    %442 = vmatpush1.xpose.msra.mxu0 0.0
    %443 = vmatprep.subr.mxu0 0.0
    %444 = vmatpush1.xpose.msra.mxu0 0.0
    %445 = vmatprep.subr.mxu0 0.0
    %446 = vmatpush1.xpose.msra.mxu0 0.0
    %447 = vmatprep.subr.mxu0 0.0
    %448 = vmatpush1.xpose.msra.mxu0 0.0
    %449 = vmatprep.subr.mxu0 0.0
    %450 = vmatpush1.xpose.msra.mxu0 0.0
    %451 = vmatprep.subr.mxu0 0.0
    %452 = vmatpush1.xpose.msra.mxu0 0.0
    %453 = vmatprep.subr.mxu0 0.0
    %454 = vmatpush1.xpose.msra.mxu0 0.0
    %455 = vmatprep.subr.mxu0 0.0
    %456 = vmatpush1.xpose.msra.mxu0 0.0
    %457 = vmatprep.subr.mxu0 0.0
    %458 = vmatpush1.xpose.msra.mxu0 0.0
    %459 = vmatprep.subr.mxu0 0.0
    %460 = vmatpush1.xpose.msra.mxu0 0.0
    %461 = vmatprep.subr.mxu0 0.0
    %462 = vmatpush1.xpose.msra.mxu0 0.0
    %463 = vmatprep.subr.mxu0 0.0
    %464 = vmatpush1.xpose.msra.mxu0 0.0
    %465 = vmatprep.subr.mxu0 0.0
    %466 = vmatpush1.xpose.msra.mxu0 0.0
    %467 = vmatprep.subr.mxu0 0.0
    %468 = vmatpush1.xpose.msra.mxu0 0.0
    %469 = vmatprep.subr.mxu0 0.0
    %470 = vmatpush1.xpose.msra.mxu0 0.0
    %471 = vmatprep.subr.mxu0 0.0
    %472 = vmatpush1.xpose.msra.mxu0 0.0
    %473 = vmatprep.subr.mxu0 0.0
    %474 = vmatpush1.xpose.msra.mxu0 0.0
    %v475 = vand.u32 %v10, 4294901760
    %476 = vmatprep.mubr.f32.mxu0 %v475
    %v477 = vand.u32 %v9, 4294901760
    %478 = vmatmul.mubr.f32.gmra.mrb[0].mxu0 %v477
    %v479 = vpop.f32.mrb[0].mxu0
    %v480 = vadd.f32 %v406, %v479
    %v481 = vpop.f32.mrb[0].mxu0
    %482 = vdwg.mxu0
    %v483 = vmul.f32 %v480, 0.00048828125
    %vm484 = vcmask 64512
    %485 = vst.msk [vmem:[#allocation2] sm:$0xff] %vm484, %v483
    // Predicated region
    $region6: #{gram.1} parent=1 // pred_check
      _
    $region7: #{gram.1} parent=1 // pred_check_branch
      %487 = sbr.rel (0) target = $region9
    $region8: #{gram.1} parent=1 // pred_region
      %s489 = ssub.s32 128, 128
      %490 = vsyncadd [#allocation3], %s489
      %s492 = sshll.u32 [#allocation2], 4
      %s493 = int_to_ptr.vmem [resolvable:$true] %s492
      %495 = dma.vmem_to_hbm [thread:$0]  %s493, 128, %s1, [#allocation3]
    $region9: #{gram.1} parent=1 // pred_fallthru
      _
    // Predicated region
    $region10: #{gram.1} parent=1 // pred_check
      _
    $region11: #{gram.1} parent=1 // pred_check_branch
      %497 = sbr.rel (0) target = $region13
    $region12: #{gram.1} parent=1 // pred_region
      %498 = dma.done [#allocation3], 128
    $region13: #{gram.1} parent=1 // pred_fallthru
      _
    %499 = vsyncpa [#allocation3], 1

</llo_original>
